<compile_context>
chip_gen: v7x
topology: tpu7x:2x2x1
jax: 0.10.0
libtpu: 0.0.40
codegen_flags: <defaults>
</compile_context>

<pallas_src>
import math
from functools import partial

import jax
import jax.numpy as jnp
from jax.experimental import pallas as pl
from jax.experimental.pallas import tpu as pltpu


def _round_up(x, m):
    return ((x + m - 1) // m) * m


def _timestep_embedder_kernel(t_ref, freqs_ref, w1_ref, b1_ref, w2_ref, b2_ref,
                              out_ref, *, n_sub, sub_rows):
    # Grid-invariant operands: DMA'd once, resident in VMEM across row tiles.
    freqs = freqs_ref[...]          # (1, half)        f32
    w1 = w1_ref[...]                # (freq, hidden)   bf16 (MXU dtype)
    b1 = b1_ref[...]                # (1, hidden)      f32
    w2 = w2_ref[...]                # (hidden, hidden) bf16 (MXU dtype)
    b2 = b2_ref[...]                # (1, hidden)      f32

    # Independent row sub-chunks: lets the scheduler co-issue EUP work
    # (cos/sin/sigmoid) of one chunk with the MXU dots of another.
    for j in range(n_sub):
        r0 = j * sub_rows
        t_sub = t_ref[r0:r0 + sub_rows, :]                  # (sub, 1)    f32
        args = t_sub * freqs                                # (sub, half) f32

        # Concat at a 128-lane boundary -> pure vreg placement, one K=freq dot.
        emb = jnp.concatenate([jnp.cos(args), jnp.sin(args)], axis=-1)

        # Linear 1 (bf16 operands, f32 accumulation) + SiLU (f32).
        h = jnp.dot(emb.astype(w1.dtype), w1,
                    preferred_element_type=jnp.float32) + b1
        h = h * jax.nn.sigmoid(h)

        # Linear 2 (bf16 operands, f32 accumulation).
        out = jnp.dot(h.astype(w2.dtype), w2,
                      preferred_element_type=jnp.float32) + b2
        out_ref[r0:r0 + sub_rows, :] = out.astype(out_ref.dtype)


def timestep_embedder(t, w1, b1, w2, b2, *,
                      frequency_embedding_size=256,
                      max_period=10000.0,
                      row_tile=512,
                      out_dtype=jnp.float32,
                      mxu_dtype=jnp.bfloat16):
    """t: (N,) float/int timesteps. Returns (N, hidden_size) embeddings."""
    # TODO(synk): odd frequency_embedding_size (zero-pad last column) not handled.
    assert frequency_embedding_size % 2 == 0, "frequency_embedding_size must be even"

    n = t.shape[0]
    freq = frequency_embedding_size
    half = freq // 2
    hidden = w1.shape[1]
    assert w1.shape == (freq, hidden)
    assert w2.shape == (hidden, hidden)

    # Row tile: multiple of 8 sublanes, at most `row_tile`, at most padded N.
    tn = min(_round_up(row_tile, 8), _round_up(n, 8))
    n_pad = _round_up(n, tn)
    grid = (n_pad // tn,)

    # Row sub-chunks inside a tile (EUP/MXU overlap).
    if tn >= 256 and (tn // 4) % 8 == 0:
        n_sub = 4
    elif tn >= 64 and (tn // 2) % 8 == 0:
        n_sub = 2
    else:
        n_sub = 1
    sub_rows = tn // n_sub

    freqs = jnp.exp(
        -math.log(max_period) * jnp.arange(half, dtype=jnp.float32) / half
    ).reshape(1, half)

    t2 = t.astype(jnp.float32).reshape(n, 1)
    if n_pad != n:
        t2 = jnp.pad(t2, ((0, n_pad - n), (0, 0)))

    w1m = w1.astype(mxu_dtype)
    w2m = w2.astype(mxu_dtype)
    b1f = b1.astype(jnp.float32).reshape(1, hidden)
    b2f = b2.astype(jnp.float32).reshape(1, hidden)

    const = lambda i: (0, 0)  # grid-invariant: weights stay resident in VMEM

    # VMEM budget.  Weights counted at 2x because Pallas double-buffers inputs
    # by default, even for grid-invariant blocks.
    # TODO(synk): single-buffer the resident weight blocks (pl.Buffered(1)) once
    # verified safe for the top-level pallas_call pipeline on this jax version.
    mxu_b = jnp.dtype(mxu_dtype).itemsize
    out_b = jnp.dtype(out_dtype).itemsize
    weight_bytes = 2 * ((freq * hidden + hidden * hidden) * mxu_b
                        + (2 * hidden + half) * 4)
    act_bytes = 2 * (tn * 1 * 4 + tn * hidden * out_b)      # double-buffered in/out
    tmp_bytes = sub_rows * (3 * half + 3 * hidden) * 4      # args/cos/sin/emb, h, out
    vmem_limit = int(1.5 * (weight_bytes + act_bytes + tmp_bytes)) + (4 << 20)
    vmem_limit = max(vmem_limit, 16 << 20)
    try:
        vmem_cap = int(pltpu.get_tpu_info().vmem_capacity_bytes)
    except Exception:
        vmem_cap = 64 << 20  # conservative fallback: v7x physical VMEM per TC
    vmem_limit = min(vmem_limit, int(0.7 * vmem_cap))

    # Megacore sharding only pays once several row tiles exist: each TC would
    # otherwise redundantly DMA its own resident copy of the weights.
    semantics = ("parallel",) if grid[0] >= 4 else ("arbitrary",)

    kernel = partial(_timestep_embedder_kernel, n_sub=n_sub, sub_rows=sub_rows)

    out = pl.pallas_call(
        kernel,
        out_shape=jax.ShapeDtypeStruct((n_pad, hidden), out_dtype),
        grid=grid,
        in_specs=[
            pl.BlockSpec((tn, 1), lambda i: (i, 0)),        # t (row-tiled)
            pl.BlockSpec((1, half), const),                 # freqs
            pl.BlockSpec((freq, hidden), const),            # w1 (bf16)
            pl.BlockSpec((1, hidden), const),               # b1
            pl.BlockSpec((hidden, hidden), const),          # w2 (bf16)
            pl.BlockSpec((1, hidden), const),               # b2
        ],
        out_specs=pl.BlockSpec((tn, hidden), lambda i: (i, 0)),
        compiler_params=pltpu.CompilerParams(
            dimension_semantics=semantics,
            vmem_limit_bytes=vmem_limit,
        ),
    )(t2, freqs, w1m, b1f, w2m, b2f)

    return out[:n]


def timestep_embedder_ref(t, w1, b1, w2, b2, *,
                          frequency_embedding_size=256, max_period=10000.0):
    half = frequency_embedding_size // 2
    freqs = jnp.exp(-math.log(max_period) * jnp.arange(half, dtype=jnp.float32) / half)
    args = t.astype(jnp.float32)[:, None] * freqs[None, :]
    emb = jnp.concatenate([jnp.cos(args), jnp.sin(args)], axis=-1)
    h = emb @ w1 + b1
    h = h * jax.nn.sigmoid(h)
    return h @ w2 + b2


if __name__ == "__main__":
    FREQ = 256             # frequency_embedding_size (module default)
    HIDDEN = 128           # hidden_size (lane-dense: multiple of 128)

    key = jax.random.PRNGKey(0)
    k_t, k_w1, k_b1, k_w2, k_b2, k_t2 = jax.random.split(key, 6)

    # Deterministic synthetic parameters (stored as (in, out)).
    w1 = jax.random.normal(k_w1, (FREQ, HIDDEN), jnp.float32) * 0.02
    b1 = jax.random.normal(k_b1, (HIDDEN,), jnp.float32) * 0.02
    w2 = jax.random.normal(k_w2, (HIDDEN, HIDDEN), jnp.float32) * 0.02
    b2 = jax.random.normal(k_b2, (HIDDEN,), jnp.float32) * 0.02

    # Tolerance is loosened vs. the f32 reference because MXU operands are bf16
    # (accumulation stays f32).
    ATOL = RTOL = 2e-2

    # 1) Small ragged batch: single tile, padded tail, no sub-chunking.
    t_small = jax.random.uniform(k_t, (10,), jnp.float32, 0.0, 1000.0)
    out_small = jax.block_until_ready(
        timestep_embedder(t_small, w1, b1, w2, b2, frequency_embedding_size=FREQ))
    ref_small = timestep_embedder_ref(t_small, w1, b1, w2, b2,
                                      frequency_embedding_size=FREQ)
    assert out_small.shape == (10, HIDDEN)
    assert jnp.allclose(out_small, ref_small, atol=ATOL, rtol=RTOL), \
        float(jnp.max(jnp.abs(out_small - ref_small)))

    # 2) Larger batch with a small row tile: multi-tile grid, ragged tail and
    #    2-way row sub-chunking inside each tile.
    t_big = jax.random.uniform(k_t2, (130,), jnp.float32, 0.0, 1000.0)
    out_big = jax.block_until_ready(
        timestep_embedder(t_big, w1, b1, w2, b2,
                          frequency_embedding_size=FREQ, row_tile=64))
    ref_big = timestep_embedder_ref(t_big, w1, b1, w2, b2,
                                    frequency_embedding_size=FREQ)
    assert out_big.shape == (130, HIDDEN)
    assert jnp.allclose(out_big, ref_big, atol=ATOL, rtol=RTOL), \
        float(jnp.max(jnp.abs(out_big - ref_big)))

    print("KERNEL_OK")
</pallas_src>

<mosaic_0001>
module attributes {stable_mosaic.version = 11 : i64} {
  func.func @_timestep_embedder_kernel(%arg0: i32, %arg1: memref<16x1xf32, #tpu.memory_space<vmem>>, %arg2: memref<1x128xf32, #tpu.memory_space<vmem>>, %arg3: memref<256x128xbf16, #tpu.memory_space<vmem>>, %arg4: memref<1x128xf32, #tpu.memory_space<vmem>>, %arg5: memref<128x128xbf16, #tpu.memory_space<vmem>>, %arg6: memref<1x128xf32, #tpu.memory_space<vmem>>, %arg7: memref<16x128xf32, #tpu.memory_space<vmem>>) attributes {dimension_semantics = [#tpu.dimension_semantics<arbitrary>], iteration_bounds = array<i64: 1>, scalar_prefetch = 0 : i64, scratch_operands = 0 : i64, tpu.core_type = #tpu.core_type<tc>, window_params = [{transform_indices = @transform_0, window_bounds = array<i64: 16, 1>}, {pipeline_mode = #tpu.pipeline_mode<synchronous>, transform_indices = @transform_1, window_bounds = array<i64: 1, 128>}, {pipeline_mode = #tpu.pipeline_mode<synchronous>, transform_indices = @transform_2, window_bounds = array<i64: 256, 128>}, {pipeline_mode = #tpu.pipeline_mode<synchronous>, transform_indices = @transform_3, window_bounds = array<i64: 1, 128>}, {pipeline_mode = #tpu.pipeline_mode<synchronous>, transform_indices = @transform_4, window_bounds = array<i64: 128, 128>}, {pipeline_mode = #tpu.pipeline_mode<synchronous>, transform_indices = @transform_5, window_bounds = array<i64: 1, 128>}, {transform_indices = @transform_6, window_bounds = array<i64: 16, 128>}]} {
    %c0 = arith.constant 0 : index
    %c0_0 = arith.constant 0 : index
    %0 = vector.load %arg2[%c0, %c0_0] : memref<1x128xf32, #tpu.memory_space<vmem>>, vector<1x128xf32>
    %c0_1 = arith.constant 0 : index
    %c0_2 = arith.constant 0 : index
    %1 = vector.load %arg3[%c0_1, %c0_2] : memref<256x128xbf16, #tpu.memory_space<vmem>>, vector<256x128xbf16>
    %c0_3 = arith.constant 0 : index
    %c0_4 = arith.constant 0 : index
    %2 = vector.load %arg4[%c0_3, %c0_4] : memref<1x128xf32, #tpu.memory_space<vmem>>, vector<1x128xf32>
    %c0_5 = arith.constant 0 : index
    %c0_6 = arith.constant 0 : index
    %3 = vector.load %arg5[%c0_5, %c0_6] : memref<128x128xbf16, #tpu.memory_space<vmem>>, vector<128x128xbf16>
    %c0_7 = arith.constant 0 : index
    %c0_8 = arith.constant 0 : index
    %4 = vector.load %arg6[%c0_7, %c0_8] : memref<1x128xf32, #tpu.memory_space<vmem>>, vector<1x128xf32>
    %c0_9 = arith.constant 0 : index
    %c0_10 = arith.constant 0 : index
    %5 = vector.load %arg1[%c0_9, %c0_10] : memref<16x1xf32, #tpu.memory_space<vmem>>, vector<16x1xf32>
    %6 = vector.broadcast %5 : vector<16x1xf32> to vector<16x128xf32>
    %7 = vector.broadcast %0 : vector<1x128xf32> to vector<16x128xf32>
    %8 = arith.mulf %6, %7 : vector<16x128xf32>
    %9 = math.cos %8 : vector<16x128xf32>
    %10 = math.sin %8 : vector<16x128xf32>
    %11 = tpu.concatenate %9, %10 in 1 : vector<16x128xf32>, vector<16x128xf32> -> vector<16x256xf32>
    %12 = arith.truncf %11 : vector<16x256xf32> to vector<16x256xbf16>
    %cst = arith.constant dense<0.000000e+00> : vector<16x128xf32>
    %13 = tpu.matmul %12, %1, %cst {dimension_numbers = #tpu.dot_dimension_numbers<[1], [0], [0], [1], [0, 0, 1, 1], [], []>} : vector<16x256xbf16>, vector<256x128xbf16>, vector<16x128xf32> -> vector<16x128xf32>
    %14 = vector.broadcast %2 : vector<1x128xf32> to vector<16x128xf32>
    %15 = arith.addf %13, %14 : vector<16x128xf32>
    %16 = arith.negf %15 : vector<16x128xf32>
    %17 = math.exp %16 : vector<16x128xf32>
    %cst_11 = arith.constant 1.000000e+00 : f32
    %18 = vector.broadcast %cst_11 : f32 to vector<16x128xf32>
    %19 = arith.addf %18, %17 : vector<16x128xf32>
    %20 = arith.divf %18, %19 : vector<16x128xf32>
    %21 = arith.mulf %15, %20 : vector<16x128xf32>
    %22 = arith.truncf %21 : vector<16x128xf32> to vector<16x128xbf16>
    %cst_12 = arith.constant dense<0.000000e+00> : vector<16x128xf32>
    %23 = tpu.matmul %22, %3, %cst_12 {dimension_numbers = #tpu.dot_dimension_numbers<[1], [0], [0], [1], [0, 0, 1, 1], [], []>} : vector<16x128xbf16>, vector<128x128xbf16>, vector<16x128xf32> -> vector<16x128xf32>
    %24 = vector.broadcast %4 : vector<1x128xf32> to vector<16x128xf32>
    %25 = arith.addf %23, %24 : vector<16x128xf32>
    %c0_13 = arith.constant 0 : index
    %c0_14 = arith.constant 0 : index
    %26 = vector.load %arg7[%c0_13, %c0_14] : memref<16x128xf32, #tpu.memory_space<vmem>>, vector<16x128xf32>
    tpu.vector_store %arg7[%c0_13, %c0_14], %25 {strides = array<i32>} : memref<16x128xf32, #tpu.memory_space<vmem>>, vector<16x128xf32>,
    return
  }
  func.func @transform_0(%arg0: i32) -> (i32, i32) {
    %c0_i32 = arith.constant 0 : i32
    %c0_i32_0 = arith.constant 0 : i32
    return %arg0, %c0_i32 : i32, i32
  }
  func.func @transform_1(%arg0: i32) -> (i32, i32) {
    %c0_i32 = arith.constant 0 : i32
    %c0_i32_0 = arith.constant 0 : i32
    %c0_i32_1 = arith.constant 0 : i32
    return %c0_i32, %c0_i32_0 : i32, i32
  }
  func.func @transform_2(%arg0: i32) -> (i32, i32) {
    %c0_i32 = arith.constant 0 : i32
    %c0_i32_0 = arith.constant 0 : i32
    %c0_i32_1 = arith.constant 0 : i32
    return %c0_i32, %c0_i32_0 : i32, i32
  }
  func.func @transform_3(%arg0: i32) -> (i32, i32) {
    %c0_i32 = arith.constant 0 : i32
    %c0_i32_0 = arith.constant 0 : i32
    %c0_i32_1 = arith.constant 0 : i32
    return %c0_i32, %c0_i32_0 : i32, i32
  }
  func.func @transform_4(%arg0: i32) -> (i32, i32) {
    %c0_i32 = arith.constant 0 : i32
    %c0_i32_0 = arith.constant 0 : i32
    %c0_i32_1 = arith.constant 0 : i32
    return %c0_i32, %c0_i32_0 : i32, i32
  }
  func.func @transform_5(%arg0: i32) -> (i32, i32) {
    %c0_i32 = arith.constant 0 : i32
    %c0_i32_0 = arith.constant 0 : i32
    %c0_i32_1 = arith.constant 0 : i32
    return %c0_i32, %c0_i32_0 : i32, i32
  }
  func.func @transform_6(%arg0: i32) -> (i32, i32) {
    %c0_i32 = arith.constant 0 : i32
    %c0_i32_0 = arith.constant 0 : i32
    return %arg0, %c0_i32 : i32, i32
  }
}

</mosaic_0001>

<llo_original>
// kernel: tpu_custom_call.1
$region0: #{tpu_custom_call.1}
  #allocation0 [shape = 'u32[]', space=smem, size = 0x4, offset = 0x4, fixed_abs, tag = 'smem constant byte address 0x4 - core index']
  #allocation1 [shape = 'u32[144,128]{1,0:T(1,128)}', space=vmem, size = 0x12000, scoped, tag = 'internal scratch']
  %s0 = inlined_call_operand.vmem [shape: f32[16,1], index: 0, kind: input, shape index: {}]
  %s1 = inlined_call_operand.vmem [shape: f32[1,128], index: 1, kind: input, shape index: {}]
  %s2 = inlined_call_operand.hbm [shape: bf16[256,128], index: 2, kind: input, shape index: {}]
  %s3 = inlined_call_operand.vmem [shape: f32[1,128], index: 3, kind: input, shape index: {}]
  %s4 = inlined_call_operand.hbm [shape: bf16[128,128], index: 4, kind: input, shape index: {}]
  %s5 = inlined_call_operand.vmem [shape: f32[1,128], index: 5, kind: input, shape index: {}]
  %s6 = inlined_call_operand.hbm [shape: f32[16,128], index: 6, kind: output, shape index: {}]
  %s7 = sld [smem:[#allocation0]]
  $region42: #{tpu_custom_call.1} parent=0
    _
  %s9 = ssub.s32 1, %s7
  %s10 = scalar_select 0, %s9, %s7
  $region1: #{tpu_custom_call.1} parent=0
    #allocation2 [shape = 'u8[65536]{0}', space=vmem, size = 0x10000, scoped, tag = 'input window, operand 2, single buffered']
    #allocation3 [shape = 's32[1]{0}', space=sflag, size = 0x4, scoped, tag = 'scoped memory for tpu_custom_call.1']
    #allocation4 [shape = 's32[1]{0}', space=sflag, size = 0x4, scoped, tag = 'scoped memory for tpu_custom_call.1']
    #allocation5 [shape = 'u8[32768]{0}', space=vmem, size = 0x8000, scoped, tag = 'input window, operand 4, single buffered']
    #allocation6 [shape = 's32[1]{0}', space=sflag, size = 0x4, scoped, tag = 'scoped memory for tpu_custom_call.1']
    #allocation7 [shape = 'u8[8192]{0}', space=vmem, size = 0x2000, scoped, tag = 'output window, operand 0, single buffered']
    %11 = vsyncpa [#allocation3], 0
    %12 = vsyncpa [#allocation6], 0
    %13 = vsyncpa [#allocation4], 0
    // Predicated region
    $region2: #{tpu_custom_call.1} parent=1 // pred_check
      _
    $region3: #{tpu_custom_call.1} parent=1 // pred_check_branch
      %15 = sbr.rel (0) target = $region5
    $region4: #{tpu_custom_call.1} parent=1 // pred_region
      _
    $region5: #{tpu_custom_call.1} parent=1 // pred_fallthru
      _
    // Predicated region
    $region6: #{tpu_custom_call.1} parent=1 // pred_check
      _
    $region7: #{tpu_custom_call.1} parent=1 // pred_check_branch
      %17 = sbr.rel (0) target = $region9
    $region8: #{tpu_custom_call.1} parent=1 // pred_region
      _
    $region9: #{tpu_custom_call.1} parent=1 // pred_fallthru
      _
    // Predicated region
    $region10: #{tpu_custom_call.1} parent=1 // pred_check
      _
    $region11: #{tpu_custom_call.1} parent=1 // pred_check_branch
      %19 = sbr.rel (0) target = $region13
    $region12: #{tpu_custom_call.1} parent=1 // pred_region
      %s21 = ssub.s32 2048, 2048
      %22 = vsyncadd [#allocation3], %s21
      %s23 = sshll.u32 [#allocation2], 4
      %s24 = int_to_ptr.vmem [resolvable:$true] %s23
      %29 = dma.hbm_to_vmem [thread:$0]  %s2, 2048, %s24, [#allocation3], 64, 64, 4
    $region13: #{tpu_custom_call.1} parent=1 // pred_fallthru
      _
    // Predicated region
    $region14: #{tpu_custom_call.1} parent=1 // pred_check
      _
    $region15: #{tpu_custom_call.1} parent=1 // pred_check_branch
      %31 = sbr.rel (0) target = $region17
    $region16: #{tpu_custom_call.1} parent=1 // pred_region
      _
    $region17: #{tpu_custom_call.1} parent=1 // pred_fallthru
      _
    // Predicated region
    $region18: #{tpu_custom_call.1} parent=1 // pred_check
      _
    $region19: #{tpu_custom_call.1} parent=1 // pred_check_branch
      %33 = sbr.rel (0) target = $region21
    $region20: #{tpu_custom_call.1} parent=1 // pred_region
      %s35 = ssub.s32 1024, 1024
      %36 = vsyncadd [#allocation6], %s35
      %s37 = sshll.u32 [#allocation5], 4
      %s38 = int_to_ptr.vmem [resolvable:$true] %s37
      %43 = dma.hbm_to_vmem [thread:$0]  %s4, 1024, %s38, [#allocation6], 64, 64, 4
    $region21: #{tpu_custom_call.1} parent=1 // pred_fallthru
      _
    // Predicated region
    $region22: #{tpu_custom_call.1} parent=1 // pred_check
      _
    $region23: #{tpu_custom_call.1} parent=1 // pred_check_branch
      %45 = sbr.rel (0) target = $region25
    $region24: #{tpu_custom_call.1} parent=1 // pred_region
      _
    $region25: #{tpu_custom_call.1} parent=1 // pred_fallthru
      _
    // Predicated region
    $region26: #{tpu_custom_call.1} parent=1 // pred_check
      _
    $region27: #{tpu_custom_call.1} parent=1 // pred_check_branch
      %47 = sbr.rel (0) target = $region29
    $region28: #{tpu_custom_call.1} parent=1 // pred_region
      %48 = dma.done [#allocation3], 2048
    $region29: #{tpu_custom_call.1} parent=1 // pred_fallthru
      _
    // Predicated region
    $region30: #{tpu_custom_call.1} parent=1 // pred_check
      _
    $region31: #{tpu_custom_call.1} parent=1 // pred_check_branch
      %50 = sbr.rel (0) target = $region33
    $region32: #{tpu_custom_call.1} parent=1 // pred_region
      %51 = dma.done [#allocation6], 1024
    $region33: #{tpu_custom_call.1} parent=1 // pred_fallthru
      _
    %v53 = vld [vmem:[%s1] sm:$0x1]
    %v54 = vld [vmem:[#allocation2] sm:$0xf]
    %v55 = vld [vmem:[#allocation2 + $0x4] sm:$0xf]
    %v56 = vld [vmem:[#allocation2 + $0x8] sm:$0xf]
    %v57 = vld [vmem:[#allocation2 + $0xc] sm:$0xf]
    %v58 = vld [vmem:[#allocation2 + $0x10] sm:$0xf]
    %v59 = vld [vmem:[#allocation2 + $0x14] sm:$0xf]
    %v60 = vld [vmem:[#allocation2 + $0x18] sm:$0xf]
    %v61 = vld [vmem:[#allocation2 + $0x1c] sm:$0xf]
    %v62 = vld [vmem:[#allocation2 + $0x20] sm:$0xf]
    %v63 = vld [vmem:[#allocation2 + $0x24] sm:$0xf]
    %v64 = vld [vmem:[#allocation2 + $0x28] sm:$0xf]
    %v65 = vld [vmem:[#allocation2 + $0x2c] sm:$0xf]
    %v66 = vld [vmem:[#allocation2 + $0x30] sm:$0xf]
    %v67 = vld [vmem:[#allocation2 + $0x34] sm:$0xf]
    %v68 = vld [vmem:[#allocation2 + $0x38] sm:$0xf]
    %v69 = vld [vmem:[#allocation2 + $0x3c] sm:$0xf]
    %v70 = vld [vmem:[#allocation2 + $0x40] sm:$0xf]
    %v71 = vld [vmem:[#allocation2 + $0x44] sm:$0xf]
    %v72 = vld [vmem:[#allocation2 + $0x48] sm:$0xf]
    %v73 = vld [vmem:[#allocation2 + $0x4c] sm:$0xf]
    %v74 = vld [vmem:[#allocation2 + $0x50] sm:$0xf]
    %v75 = vld [vmem:[#allocation2 + $0x54] sm:$0xf]
    %v76 = vld [vmem:[#allocation2 + $0x58] sm:$0xf]
    %v77 = vld [vmem:[#allocation2 + $0x5c] sm:$0xf]
    %v78 = vld [vmem:[#allocation2 + $0x60] sm:$0xf]
    %v79 = vld [vmem:[#allocation2 + $0x64] sm:$0xf]
    %v80 = vld [vmem:[#allocation2 + $0x68] sm:$0xf]
    %v81 = vld [vmem:[#allocation2 + $0x6c] sm:$0xf]
    %v82 = vld [vmem:[#allocation2 + $0x70] sm:$0xf]
    %v83 = vld [vmem:[#allocation2 + $0x74] sm:$0xf]
    %v84 = vld [vmem:[#allocation2 + $0x78] sm:$0xf]
    %v85 = vld [vmem:[#allocation2 + $0x7c] sm:$0xf]
    %v86 = vld [vmem:[%s3] sm:$0x1]
    %v87 = vld [vmem:[#allocation5] sm:$0xf]
    %v88 = vld [vmem:[#allocation5 + $0x4] sm:$0xf]
    %v89 = vld [vmem:[#allocation5 + $0x8] sm:$0xf]
    %v90 = vld [vmem:[#allocation5 + $0xc] sm:$0xf]
    %v91 = vld [vmem:[#allocation5 + $0x10] sm:$0xf]
    %v92 = vld [vmem:[#allocation5 + $0x14] sm:$0xf]
    %v93 = vld [vmem:[#allocation5 + $0x18] sm:$0xf]
    %v94 = vld [vmem:[#allocation5 + $0x1c] sm:$0xf]
    %v95 = vld [vmem:[#allocation5 + $0x20] sm:$0xf]
    %v96 = vld [vmem:[#allocation5 + $0x24] sm:$0xf]
    %v97 = vld [vmem:[#allocation5 + $0x28] sm:$0xf]
    %v98 = vld [vmem:[#allocation5 + $0x2c] sm:$0xf]
    %v99 = vld [vmem:[#allocation5 + $0x30] sm:$0xf]
    %v100 = vld [vmem:[#allocation5 + $0x34] sm:$0xf]
    %v101 = vld [vmem:[#allocation5 + $0x38] sm:$0xf]
    %v102 = vld [vmem:[#allocation5 + $0x3c] sm:$0xf]
    %v103 = vld [vmem:[%s5] sm:$0x1]
    %v104 = vld [vmem:[%s0] sm:$0xff]
    %v105 = vld [vmem:[%s0 + $0x8] sm:$0xff]
    %107 = vset.pattern.permute.xlu0 0
    %108 = vperm.xlu0 %107, %v104
    %v109 = vpop.permute.xlu0 %108
    %112 = vset.pattern.permute.xlu0 0
    %113 = vperm.xlu0 %112, %v105
    %v114 = vpop.permute.xlu0 %113
    %v117 = vlaneseq
    %v118 = vshrl.u32 %v117, 7
    %v119 = vsub.s32 0, %v118
    %v120 = vrot.slane %v53, %v119
    %v122 = vmul.f32 %v109, %v120
    %v123 = vmul.f32 %v114, %v120
    %v124 = vand.u32 2147483647, %v122
    %vm125 = vcmp.le.f32.partialorder %v124, 0.7853982
    %vm126 = vcmp.lt.s32.totalorder %v122, 0
    %v127 = vand.u32 %v122, 2139095040
    %v128 = vshrl.u32 %v127, 23
    %v129 = vsub.s32 %v128, 127
    %v130 = vand.u32 2147483647, %v122
    %v131 = vand.u32 %v130, 8388607
    %v132 = vor.u32 %v131, 8388608
    %v133 = vsub.s32 0, %v132
    %v134 = vadd.s32 %v129, 1
    %vm135 = vcmp.gt.s32.totalorder %v134, 0
    %v136 = vsel %vm135, %v134, 0
    %v137 = vshrl.u32 %v136, 5
    %v138 = vand.u32 %v136, 31
    %v139 = vsub.s32 32, %v138
    %v140 = vshrl.u32 683565275, %v139
    %v141 = vshll.u32 683565275, %v138
    %v142 = vshrl.u32 2475754826, %v139
    %v143 = vor.u32 %v141, %v142
    %v144 = vshll.u32 2475754826, %v138
    %v145 = vshrl.u32 2131351028, %v139
    %v146 = vor.u32 %v144, %v145
    %v147 = vshll.u32 2131351028, %v138
    %v148 = vshrl.u32 2102212464, %v139
    %v149 = vor.u32 %v147, %v148
    %v150 = vshll.u32 2102212464, %v138
    %v151 = vshrl.u32 920167782, %v139
    %v152 = vor.u32 %v150, %v151
    %v153 = vshll.u32 920167782, %v138
    %v154 = vshrl.u32 1326507024, %v139
    %v155 = vor.u32 %v153, %v154
    %vm156 = vcmp.lt.s32.totalorder %v137, 1
    %vm157 = vcmp.lt.s32.totalorder %v137, 2
    %vm158 = vcmp.lt.s32.totalorder %v137, 3
    %vm159 = vcmp.lt.s32.totalorder %v137, 4
    %v160 = vsel %vm156, %v140, %v143
    %v161 = vsel %vm159, %v149, 2102212464
    %v162 = vsel %vm158, %v146, %v161
    %v163 = vsel %vm157, %v160, %v162
    %v164 = vsel %vm156, %v143, %v146
    %v165 = vsel %vm159, %v152, 920167782
    %v166 = vsel %vm158, %v149, %v165
    %v167 = vsel %vm157, %v164, %v166
    %v168 = vsel %vm156, %v146, %v149
    %v169 = vsel %vm159, %v155, 1326507024
    %v170 = vsel %vm158, %v152, %v169
    %v171 = vsel %vm157, %v168, %v170
    %v172 = vshll.u32 %v132, 8
    %v173 = vmul.u32.u64.compose %v172, %v171
    %v174 = vextract.low.u32 %v173
    %v175 = vextract.high.u32 %v173
    %v176 = vmul.u32.u64.compose %v172, %v167
    %v177 = vextract.low.u32 %v176
    %v178 = vextract.high.u32 %v176
    %v179 = vmul.u32 %v172, %v163
    %v180 = vadd.s32 %v175, %v177
    %vm181 = vc.u32 %v175, %v177
    %v182 = vadd.s32 %v178, 1
    %v183 = vsel %vm181, %v182, %v178
    %v184 = vadd.s32 %v179, %v183
    %v185 = vadd.s32 %v184, 536870912
    %v186 = vshrl.u32 %v185, 30
    %v187 = vshll.u32 %v186, 30
    %v188 = vsub.s32 %v184, %v187
    %vm189 = vcmp.lt.s32.totalorder %v188, 0
    %v190 = vsub.s32 0, %v188
    %v191 = vsel %vm189, %v190, %v188
    %v192 = vclz %v191
    %v193 = vsub.s32 %v192, 2
    %vm194 = vcmp.gt.s32.totalorder 0, %v193
    %v195 = vsel %vm194, 0, %v193
    %v196 = vsub.s32 32, %v195
    %v197 = vshll.u32 %v188, %v195
    %v198 = vshrl.u32 %v180, %v196
    %v199 = vor.u32 %v197, %v198
    %v200 = vsub.s32 4294967266, %v195
    %v201 = vadd.s32 %v200, 127
    %v202 = vshll.u32 %v201, 23
    %v203 = vor.u32 4788187, %v202
    %v204 = vand.u32 2147483647, %v203
    %v206 = vcvt.s32.f32 %v199
    %v207 = vmul.f32 %v206, %v204
    %v208 = vxor.u32 %v207, 2147483648
    %v209 = vsel %vm126, %v208, %v207
    %v210 = vsub.s32 4, %v186
    %v211 = vsel %vm126, %v210, %v186
    %v212 = vsel %vm125, %v122, %v209
    %v213 = vsel %vm125, 0, %v211
    %v214 = vcosq.f32.pop %v212
    %v215 = vsinq.f32.pop %v212
    %vm216 = vweird.f32 %v122
    %v217 = vand.u32 %v213, 3
    %vm218 = vcmp.lt.s32.totalorder %v217, 2
    %vm219 = vcmp.eq.s32.totalorder %v217, 0
    %v220 = vxor.u32 %v215, 2147483648
    %v221 = vsel %vm219, %v214, %v220
    %vm222 = vcmp.eq.s32.totalorder %v217, 2
    %v223 = vxor.u32 %v214, 2147483648
    %v224 = vsel %vm222, %v223, %v215
    %v225 = vsel %vm218, %v221, %v224
    %v226 = vsel %vm216, nan, %v225
    %v227 = vand.u32 2147483647, %v123
    %vm228 = vcmp.le.f32.partialorder %v227, 0.7853982
    %vm229 = vcmp.lt.s32.totalorder %v123, 0
    %v230 = vand.u32 %v123, 2139095040
    %v231 = vshrl.u32 %v230, 23
    %v232 = vsub.s32 %v231, 127
    %v233 = vand.u32 2147483647, %v123
    %v234 = vand.u32 %v233, 8388607
    %v235 = vor.u32 %v234, 8388608
    %v236 = vsub.s32 0, %v235
    %v237 = vadd.s32 %v232, 1
    %vm238 = vcmp.gt.s32.totalorder %v237, 0
    %v239 = vsel %vm238, %v237, 0
    %v240 = vshrl.u32 %v239, 5
    %v241 = vand.u32 %v239, 31
    %v242 = vsub.s32 32, %v241
    %v243 = vshrl.u32 683565275, %v242
    %v244 = vshll.u32 683565275, %v241
    %v245 = vshrl.u32 2475754826, %v242
    %v246 = vor.u32 %v244, %v245
    %v247 = vshll.u32 2475754826, %v241
    %v248 = vshrl.u32 2131351028, %v242
    %v249 = vor.u32 %v247, %v248
    %v250 = vshll.u32 2131351028, %v241
    %v251 = vshrl.u32 2102212464, %v242
    %v252 = vor.u32 %v250, %v251
    %v253 = vshll.u32 2102212464, %v241
    %v254 = vshrl.u32 920167782, %v242
    %v255 = vor.u32 %v253, %v254
    %v256 = vshll.u32 920167782, %v241
    %v257 = vshrl.u32 1326507024, %v242
    %v258 = vor.u32 %v256, %v257
    %vm259 = vcmp.lt.s32.totalorder %v240, 1
    %vm260 = vcmp.lt.s32.totalorder %v240, 2
    %vm261 = vcmp.lt.s32.totalorder %v240, 3
    %vm262 = vcmp.lt.s32.totalorder %v240, 4
    %v263 = vsel %vm259, %v243, %v246
    %v264 = vsel %vm262, %v252, 2102212464
    %v265 = vsel %vm261, %v249, %v264
    %v266 = vsel %vm260, %v263, %v265
    %v267 = vsel %vm259, %v246, %v249
    %v268 = vsel %vm262, %v255, 920167782
    %v269 = vsel %vm261, %v252, %v268
    %v270 = vsel %vm260, %v267, %v269
    %v271 = vsel %vm259, %v249, %v252
    %v272 = vsel %vm262, %v258, 1326507024
    %v273 = vsel %vm261, %v255, %v272
    %v274 = vsel %vm260, %v271, %v273
    %v275 = vshll.u32 %v235, 8
    %v276 = vmul.u32.u64.compose %v275, %v274
    %v277 = vextract.low.u32 %v276
    %v278 = vextract.high.u32 %v276
    %v279 = vmul.u32.u64.compose %v275, %v270
    %v280 = vextract.low.u32 %v279
    %v281 = vextract.high.u32 %v279
    %v282 = vmul.u32 %v275, %v266
    %v283 = vadd.s32 %v278, %v280
    %vm284 = vc.u32 %v278, %v280
    %v285 = vadd.s32 %v281, 1
    %v286 = vsel %vm284, %v285, %v281
    %v287 = vadd.s32 %v282, %v286
    %v288 = vadd.s32 %v287, 536870912
    %v289 = vshrl.u32 %v288, 30
    %v290 = vshll.u32 %v289, 30
    %v291 = vsub.s32 %v287, %v290
    %vm292 = vcmp.lt.s32.totalorder %v291, 0
    %v293 = vsub.s32 0, %v291
    %v294 = vsel %vm292, %v293, %v291
    %v295 = vclz %v294
    %v296 = vsub.s32 %v295, 2
    %vm297 = vcmp.gt.s32.totalorder 0, %v296
    %v298 = vsel %vm297, 0, %v296
    %v299 = vsub.s32 32, %v298
    %v300 = vshll.u32 %v291, %v298
    %v301 = vshrl.u32 %v283, %v299
    %v302 = vor.u32 %v300, %v301
    %v303 = vsub.s32 4294967266, %v298
    %v304 = vadd.s32 %v303, 127
    %v305 = vshll.u32 %v304, 23
    %v306 = vor.u32 4788187, %v305
    %v307 = vand.u32 2147483647, %v306
    %v309 = vcvt.s32.f32 %v302
    %v310 = vmul.f32 %v309, %v307
    %v311 = vxor.u32 %v310, 2147483648
    %v312 = vsel %vm229, %v311, %v310
    %v313 = vsub.s32 4, %v289
    %v314 = vsel %vm229, %v313, %v289
    %v315 = vsel %vm228, %v123, %v312
    %v316 = vsel %vm228, 0, %v314
    %v317 = vcosq.f32.pop %v315
    %v318 = vsinq.f32.pop %v315
    %vm319 = vweird.f32 %v123
    %v320 = vand.u32 %v316, 3
    %vm321 = vcmp.lt.s32.totalorder %v320, 2
    %vm322 = vcmp.eq.s32.totalorder %v320, 0
    %v323 = vxor.u32 %v318, 2147483648
    %v324 = vsel %vm322, %v317, %v323
    %vm325 = vcmp.eq.s32.totalorder %v320, 2
    %v326 = vxor.u32 %v317, 2147483648
    %v327 = vsel %vm325, %v326, %v318
    %v328 = vsel %vm321, %v324, %v327
    %v329 = vsel %vm319, nan, %v328
    %v330 = vand.u32 2147483647, %v122
    %vm331 = vcmp.le.f32.partialorder %v330, 0.7853982
    %vm332 = vcmp.lt.s32.totalorder %v122, 0
    %v333 = vand.u32 %v122, 2139095040
    %v334 = vshrl.u32 %v333, 23
    %v335 = vsub.s32 %v334, 127
    %v336 = vand.u32 2147483647, %v122
    %v337 = vand.u32 %v336, 8388607
    %v338 = vor.u32 %v337, 8388608
    %v339 = vsub.s32 0, %v338
    %v340 = vadd.s32 %v335, 1
    %vm341 = vcmp.gt.s32.totalorder %v340, 0
    %v342 = vsel %vm341, %v340, 0
    %v343 = vshrl.u32 %v342, 5
    %v344 = vand.u32 %v342, 31
    %v345 = vsub.s32 32, %v344
    %v346 = vshrl.u32 683565275, %v345
    %v347 = vshll.u32 683565275, %v344
    %v348 = vshrl.u32 2475754826, %v345
    %v349 = vor.u32 %v347, %v348
    %v350 = vshll.u32 2475754826, %v344
    %v351 = vshrl.u32 2131351028, %v345
    %v352 = vor.u32 %v350, %v351
    %v353 = vshll.u32 2131351028, %v344
    %v354 = vshrl.u32 2102212464, %v345
    %v355 = vor.u32 %v353, %v354
    %v356 = vshll.u32 2102212464, %v344
    %v357 = vshrl.u32 920167782, %v345
    %v358 = vor.u32 %v356, %v357
    %v359 = vshll.u32 920167782, %v344
    %v360 = vshrl.u32 1326507024, %v345
    %v361 = vor.u32 %v359, %v360
    %vm362 = vcmp.lt.s32.totalorder %v343, 1
    %vm363 = vcmp.lt.s32.totalorder %v343, 2
    %vm364 = vcmp.lt.s32.totalorder %v343, 3
    %vm365 = vcmp.lt.s32.totalorder %v343, 4
    %v366 = vsel %vm362, %v346, %v349
    %v367 = vsel %vm365, %v355, 2102212464
    %v368 = vsel %vm364, %v352, %v367
    %v369 = vsel %vm363, %v366, %v368
    %v370 = vsel %vm362, %v349, %v352
    %v371 = vsel %vm365, %v358, 920167782
    %v372 = vsel %vm364, %v355, %v371
    %v373 = vsel %vm363, %v370, %v372
    %v374 = vsel %vm362, %v352, %v355
    %v375 = vsel %vm365, %v361, 1326507024
    %v376 = vsel %vm364, %v358, %v375
    %v377 = vsel %vm363, %v374, %v376
    %v378 = vshll.u32 %v338, 8
    %v379 = vmul.u32.u64.compose %v378, %v377
    %v380 = vextract.low.u32 %v379
    %v381 = vextract.high.u32 %v379
    %v382 = vmul.u32.u64.compose %v378, %v373
    %v383 = vextract.low.u32 %v382
    %v384 = vextract.high.u32 %v382
    %v385 = vmul.u32 %v378, %v369
    %v386 = vadd.s32 %v381, %v383
    %vm387 = vc.u32 %v381, %v383
    %v388 = vadd.s32 %v384, 1
    %v389 = vsel %vm387, %v388, %v384
    %v390 = vadd.s32 %v385, %v389
    %v391 = vadd.s32 %v390, 536870912
    %v392 = vshrl.u32 %v391, 30
    %v393 = vshll.u32 %v392, 30
    %v394 = vsub.s32 %v390, %v393
    %vm395 = vcmp.lt.s32.totalorder %v394, 0
    %v396 = vsub.s32 0, %v394
    %v397 = vsel %vm395, %v396, %v394
    %v398 = vclz %v397
    %v399 = vsub.s32 %v398, 2
    %vm400 = vcmp.gt.s32.totalorder 0, %v399
    %v401 = vsel %vm400, 0, %v399
    %v402 = vsub.s32 32, %v401
    %v403 = vshll.u32 %v394, %v401
    %v404 = vshrl.u32 %v386, %v402
    %v405 = vor.u32 %v403, %v404
    %v406 = vsub.s32 4294967266, %v401
    %v407 = vadd.s32 %v406, 127
    %v408 = vshll.u32 %v407, 23
    %v409 = vor.u32 4788187, %v408
    %v410 = vand.u32 2147483647, %v409
    %v412 = vcvt.s32.f32 %v405
    %v413 = vmul.f32 %v412, %v410
    %v414 = vxor.u32 %v413, 2147483648
    %v415 = vsel %vm332, %v414, %v413
    %v416 = vsub.s32 4, %v392
    %v417 = vsel %vm332, %v416, %v392
    %v418 = vsel %vm331, %v122, %v415
    %v419 = vsel %vm331, 0, %v417
    %v420 = vcosq.f32.pop %v418
    %v421 = vsinq.f32.pop %v418
    %vm422 = vweird.f32 %v122
    %v423 = vadd.s32 %v419, 3
    %v424 = vand.u32 %v423, 3
    %vm425 = vcmp.lt.s32.totalorder %v424, 2
    %vm426 = vcmp.eq.s32.totalorder %v424, 0
    %v427 = vxor.u32 %v421, 2147483648
    %v428 = vsel %vm426, %v420, %v427
    %vm429 = vcmp.eq.s32.totalorder %v424, 2
    %v430 = vxor.u32 %v420, 2147483648
    %v431 = vsel %vm429, %v430, %v421
    %v432 = vsel %vm425, %v428, %v431
    %v433 = vsel %vm422, nan, %v432
    %v434 = vand.u32 2147483647, %v123
    %vm435 = vcmp.le.f32.partialorder %v434, 0.7853982
    %vm436 = vcmp.lt.s32.totalorder %v123, 0
    %v437 = vand.u32 %v123, 2139095040
    %v438 = vshrl.u32 %v437, 23
    %v439 = vsub.s32 %v438, 127
    %v440 = vand.u32 2147483647, %v123
    %v441 = vand.u32 %v440, 8388607
    %v442 = vor.u32 %v441, 8388608
    %v443 = vsub.s32 0, %v442
    %v444 = vadd.s32 %v439, 1
    %vm445 = vcmp.gt.s32.totalorder %v444, 0
    %v446 = vsel %vm445, %v444, 0
    %v447 = vshrl.u32 %v446, 5
    %v448 = vand.u32 %v446, 31
    %v449 = vsub.s32 32, %v448
    %v450 = vshrl.u32 683565275, %v449
    %v451 = vshll.u32 683565275, %v448
    %v452 = vshrl.u32 2475754826, %v449
    %v453 = vor.u32 %v451, %v452
    %v454 = vshll.u32 2475754826, %v448
    %v455 = vshrl.u32 2131351028, %v449
    %v456 = vor.u32 %v454, %v455
    %v457 = vshll.u32 2131351028, %v448
    %v458 = vshrl.u32 2102212464, %v449
    %v459 = vor.u32 %v457, %v458
    %v460 = vshll.u32 2102212464, %v448
    %v461 = vshrl.u32 920167782, %v449
    %v462 = vor.u32 %v460, %v461
    %v463 = vshll.u32 920167782, %v448
    %v464 = vshrl.u32 1326507024, %v449
    %v465 = vor.u32 %v463, %v464
    %vm466 = vcmp.lt.s32.totalorder %v447, 1
    %vm467 = vcmp.lt.s32.totalorder %v447, 2
    %vm468 = vcmp.lt.s32.totalorder %v447, 3
    %vm469 = vcmp.lt.s32.totalorder %v447, 4
    %v470 = vsel %vm466, %v450, %v453
    %v471 = vsel %vm469, %v459, 2102212464
    %v472 = vsel %vm468, %v456, %v471
    %v473 = vsel %vm467, %v470, %v472
    %v474 = vsel %vm466, %v453, %v456
    %v475 = vsel %vm469, %v462, 920167782
    %v476 = vsel %vm468, %v459, %v475
    %v477 = vsel %vm467, %v474, %v476
    %v478 = vsel %vm466, %v456, %v459
    %v479 = vsel %vm469, %v465, 1326507024
    %v480 = vsel %vm468, %v462, %v479
    %v481 = vsel %vm467, %v478, %v480
    %v482 = vshll.u32 %v442, 8
    %v483 = vmul.u32.u64.compose %v482, %v481
    %v484 = vextract.low.u32 %v483
    %v485 = vextract.high.u32 %v483
    %v486 = vmul.u32.u64.compose %v482, %v477
    %v487 = vextract.low.u32 %v486
    %v488 = vextract.high.u32 %v486
    %v489 = vmul.u32 %v482, %v473
    %v490 = vadd.s32 %v485, %v487
    %vm491 = vc.u32 %v485, %v487
    %v492 = vadd.s32 %v488, 1
    %v493 = vsel %vm491, %v492, %v488
    %v494 = vadd.s32 %v489, %v493
    %v495 = vadd.s32 %v494, 536870912
    %v496 = vshrl.u32 %v495, 30
    %v497 = vshll.u32 %v496, 30
    %v498 = vsub.s32 %v494, %v497
    %vm499 = vcmp.lt.s32.totalorder %v498, 0
    %v500 = vsub.s32 0, %v498
    %v501 = vsel %vm499, %v500, %v498
    %v502 = vclz %v501
    %v503 = vsub.s32 %v502, 2
    %vm504 = vcmp.gt.s32.totalorder 0, %v503
    %v505 = vsel %vm504, 0, %v503
    %v506 = vsub.s32 32, %v505
    %v507 = vshll.u32 %v498, %v505
    %v508 = vshrl.u32 %v490, %v506
    %v509 = vor.u32 %v507, %v508
    %v510 = vsub.s32 4294967266, %v505
    %v511 = vadd.s32 %v510, 127
    %v512 = vshll.u32 %v511, 23
    %v513 = vor.u32 4788187, %v512
    %v514 = vand.u32 2147483647, %v513
    %v516 = vcvt.s32.f32 %v509
    %v517 = vmul.f32 %v516, %v514
    %v518 = vxor.u32 %v517, 2147483648
    %v519 = vsel %vm436, %v518, %v517
    %v520 = vsub.s32 4, %v496
    %v521 = vsel %vm436, %v520, %v496
    %v522 = vsel %vm435, %v123, %v519
    %v523 = vsel %vm435, 0, %v521
    %v524 = vcosq.f32.pop %v522
    %v525 = vsinq.f32.pop %v522
    %vm526 = vweird.f32 %v123
    %v527 = vadd.s32 %v523, 3
    %v528 = vand.u32 %v527, 3
    %vm529 = vcmp.lt.s32.totalorder %v528, 2
    %vm530 = vcmp.eq.s32.totalorder %v528, 0
    %v531 = vxor.u32 %v525, 2147483648
    %v532 = vsel %vm530, %v524, %v531
    %vm533 = vcmp.eq.s32.totalorder %v528, 2
    %v534 = vxor.u32 %v524, 2147483648
    %v535 = vsel %vm533, %v534, %v525
    %v536 = vsel %vm529, %v532, %v535
    %v537 = vsel %vm526, nan, %v536
    %v538 = vpack.c.bf16 %v329, %v226
    %v539 = vpack.c.bf16 %v537, %v433
    %v541 = vlaneseq
    %v542 = vshrl.u32 %v541, 7
    %v543 = vsub.s32 0, %v542
    %v544 = vrot.slane %v86, %v543
    %v578 = vunpack.c.l.b16 %v54
    %v579 = vunpack.c.l.b16 %v55
    %v580 = vunpack.c.l.b16 %v56
    %v581 = vunpack.c.l.b16 %v57
    %v582 = vunpack.c.l.b16 %v58
    %v583 = vunpack.c.l.b16 %v59
    %v584 = vunpack.c.l.b16 %v60
    %v585 = vunpack.c.l.b16 %v61
    %v586 = vunpack.c.l.b16 %v62
    %v587 = vunpack.c.l.b16 %v63
    %v588 = vunpack.c.l.b16 %v64
    %v589 = vunpack.c.l.b16 %v65
    %v590 = vunpack.c.l.b16 %v66
    %v591 = vunpack.c.l.b16 %v67
    %v592 = vunpack.c.l.b16 %v68
    %v593 = vunpack.c.l.b16 %v69
    %v594 = vunpack.c.l.b16 %v70
    %v595 = vunpack.c.l.b16 %v71
    %v596 = vunpack.c.l.b16 %v72
    %v597 = vunpack.c.l.b16 %v73
    %v598 = vunpack.c.l.b16 %v74
    %v599 = vunpack.c.l.b16 %v75
    %v600 = vunpack.c.l.b16 %v76
    %v601 = vunpack.c.l.b16 %v77
    %v602 = vunpack.c.l.b16 %v78
    %v603 = vunpack.c.l.b16 %v79
    %v604 = vunpack.c.l.b16 %v80
    %v605 = vunpack.c.l.b16 %v81
    %v606 = vunpack.c.l.b16 %v82
    %v607 = vunpack.c.l.b16 %v83
    %v608 = vunpack.c.l.b16 %v84
    %v609 = vunpack.c.l.b16 %v85
    %v610 = vpack.c.b16 %v579, %v578
    %v611 = vpack.c.b16 %v581, %v580
    %v612 = vpack.c.b16 %v583, %v582
    %v613 = vpack.c.b16 %v585, %v584
    %v614 = vpack.c.b16 %v587, %v586
    %v615 = vpack.c.b16 %v589, %v588
    %v616 = vpack.c.b16 %v591, %v590
    %v617 = vpack.c.b16 %v593, %v592
    %v618 = vpack.c.b16 %v595, %v594
    %v619 = vpack.c.b16 %v597, %v596
    %v620 = vpack.c.b16 %v599, %v598
    %v621 = vpack.c.b16 %v601, %v600
    %v622 = vpack.c.b16 %v603, %v602
    %v623 = vpack.c.b16 %v605, %v604
    %v624 = vpack.c.b16 %v607, %v606
    %v625 = vpack.c.b16 %v609, %v608
    %642 = vmatprep.subr.bf16.mxu0 0
    %643 = vmatpush1.bf16.msra.mxu0 %v610
    %644 = vmatprep.subr.bf16.mxu0 0
    %645 = vmatpush1.bf16.msra.mxu0 %v611
    %646 = vmatprep.subr.bf16.mxu0 0
    %647 = vmatpush1.bf16.msra.mxu0 %v612
    %648 = vmatprep.subr.bf16.mxu0 0
    %649 = vmatpush1.bf16.msra.mxu0 %v613
    %650 = vmatprep.subr.bf16.mxu0 0
    %651 = vmatpush1.bf16.msra.mxu0 %v614
    %652 = vmatprep.subr.bf16.mxu0 0
    %653 = vmatpush1.bf16.msra.mxu0 %v615
    %654 = vmatprep.subr.bf16.mxu0 0
    %655 = vmatpush1.bf16.msra.mxu0 %v616
    %656 = vmatprep.subr.bf16.mxu0 0
    %657 = vmatpush1.bf16.msra.mxu0 %v617
    %658 = vmatprep.subr.bf16.mxu0 0
    %659 = vmatpush1.bf16.msra.mxu0 %v618
    %660 = vmatprep.subr.bf16.mxu0 0
    %661 = vmatpush1.bf16.msra.mxu0 %v619
    %662 = vmatprep.subr.bf16.mxu0 0
    %663 = vmatpush1.bf16.msra.mxu0 %v620
    %664 = vmatprep.subr.bf16.mxu0 0
    %665 = vmatpush1.bf16.msra.mxu0 %v621
    %666 = vmatprep.subr.bf16.mxu0 0
    %667 = vmatpush1.bf16.msra.mxu0 %v622
    %668 = vmatprep.subr.bf16.mxu0 0
    %669 = vmatpush1.bf16.msra.mxu0 %v623
    %670 = vmatprep.subr.bf16.mxu0 0
    %671 = vmatpush1.bf16.msra.mxu0 %v624
    %672 = vmatprep.subr.bf16.mxu0 0
    %673 = vmatpush1.bf16.msra.mxu0 %v625
    %674 = vmatprep.mubr.bf16.mxu0 %v539
    %675 = vmatmul.mubr.bf16.gmra.mrb[0].mxu0 %v538
    %v676 = vpop.f32.mrb[0].mxu0
    %v677 = vadd.f32 %v544, %v676
    %v678 = vpop.f32.mrb[0].mxu0
    %v679 = vpop.f32.mrb[0].mxu0
    %v680 = vadd.f32 %v544, %v679
    %v681 = vpop.f32.mrb[0].mxu0
    %682 = vdwg.mxu0
    %v683 = vxor.u32 %v677, 2147483648
    %v684 = vxor.u32 %v680, 2147483648
    %v685 = vmul.f32 %v683, 1.442695
    %v686 = vpow.pop %v685
    %v687 = vmul.f32 %v684, 1.442695
    %v688 = vpow.pop %v687
    %v689 = vadd.f32 %v686, 1.0
    %v690 = vadd.f32 %v688, 1.0
    %v691 = vrcp.pop %v689
    %v692 = vmul.f32 1.0, %v691
    %v693 = vrcp.pop %v690
    %v694 = vmul.f32 1.0, %v693
    %v695 = vmul.f32 %v677, %v692
    %v696 = vmul.f32 %v680, %v694
    %v697 = vpack.c.bf16 %v696, %v695
    %v699 = vlaneseq
    %v700 = vshrl.u32 %v699, 7
    %v701 = vsub.s32 0, %v700
    %v702 = vrot.slane %v103, %v701
    %v720 = vunpack.c.l.b16 %v87
    %v721 = vunpack.c.l.b16 %v88
    %v722 = vunpack.c.l.b16 %v89
    %v723 = vunpack.c.l.b16 %v90
    %v724 = vunpack.c.l.b16 %v91
    %v725 = vunpack.c.l.b16 %v92
    %v726 = vunpack.c.l.b16 %v93
    %v727 = vunpack.c.l.b16 %v94
    %v728 = vunpack.c.l.b16 %v95
    %v729 = vunpack.c.l.b16 %v96
    %v730 = vunpack.c.l.b16 %v97
    %v731 = vunpack.c.l.b16 %v98
    %v732 = vunpack.c.l.b16 %v99
    %v733 = vunpack.c.l.b16 %v100
    %v734 = vunpack.c.l.b16 %v101
    %v735 = vunpack.c.l.b16 %v102
    %v736 = vpack.c.b16 %v721, %v720
    %v737 = vpack.c.b16 %v723, %v722
    %v738 = vpack.c.b16 %v725, %v724
    %v739 = vpack.c.b16 %v727, %v726
    %v740 = vpack.c.b16 %v729, %v728
    %v741 = vpack.c.b16 %v731, %v730
    %v742 = vpack.c.b16 %v733, %v732
    %v743 = vpack.c.b16 %v735, %v734
    %752 = vmatprep.subr.bf16.mxu0 0
    %753 = vmatpush1.bf16.msra.mxu0 %v736
    %754 = vmatprep.subr.bf16.mxu0 0
    %755 = vmatpush1.bf16.msra.mxu0 %v737
    %756 = vmatprep.subr.bf16.mxu0 0
    %757 = vmatpush1.bf16.msra.mxu0 %v738
    %758 = vmatprep.subr.bf16.mxu0 0
    %759 = vmatpush1.bf16.msra.mxu0 %v739
    %760 = vmatprep.subr.bf16.mxu0 0
    %761 = vmatpush1.bf16.msra.mxu0 %v740
    %762 = vmatprep.subr.bf16.mxu0 0
    %763 = vmatpush1.bf16.msra.mxu0 %v741
    %764 = vmatprep.subr.bf16.mxu0 0
    %765 = vmatpush1.bf16.msra.mxu0 %v742
    %766 = vmatprep.subr.bf16.mxu0 0
    %767 = vmatpush1.bf16.msra.mxu0 %v743
    %768 = vmatprep.subr.bf16.mxu0 0
    %769 = vmatpush1.bf16.msra.mxu0 0
    %770 = vmatprep.subr.bf16.mxu0 0
    %771 = vmatpush1.bf16.msra.mxu0 0
    %772 = vmatprep.subr.bf16.mxu0 0
    %773 = vmatpush1.bf16.msra.mxu0 0
    %774 = vmatprep.subr.bf16.mxu0 0
    %775 = vmatpush1.bf16.msra.mxu0 0
    %776 = vmatprep.subr.bf16.mxu0 0
    %777 = vmatpush1.bf16.msra.mxu0 0
    %778 = vmatprep.subr.bf16.mxu0 0
    %779 = vmatpush1.bf16.msra.mxu0 0
    %780 = vmatprep.subr.bf16.mxu0 0
    %781 = vmatpush1.bf16.msra.mxu0 0
    %782 = vmatprep.subr.bf16.mxu0 0
    %783 = vmatpush1.bf16.msra.mxu0 0
    %784 = vmatprep.mubr.bf16.mxu0 0
    %785 = vmatmul.mubr.bf16.gmra.mrb[0].mxu0 %v697
    %v786 = vpop.f32.mrb[0].mxu0
    %v787 = vadd.f32 %v702, %v786
    %v788 = vpop.f32.mrb[0].mxu0
    %v789 = vpop.f32.mrb[0].mxu0
    %v790 = vadd.f32 %v702, %v789
    %v791 = vpop.f32.mrb[0].mxu0
    %792 = vdwg.mxu0
    %793 = vst [vmem:[#allocation7] sm:$0xff] %v787
    %794 = vst [vmem:[#allocation7 + $0x8] sm:$0xff] %v790
    // Predicated region
    $region34: #{tpu_custom_call.1} parent=1 // pred_check
      _
    $region35: #{tpu_custom_call.1} parent=1 // pred_check_branch
      %796 = sbr.rel (0) target = $region37
    $region36: #{tpu_custom_call.1} parent=1 // pred_region
      %s798 = ssub.s32 256, 256
      %799 = vsyncadd [#allocation4], %s798
      %s800 = sshll.u32 [#allocation7], 4
      %s801 = int_to_ptr.vmem [resolvable:$true] %s800
      %806 = dma.vmem_to_hbm [thread:$0]  %s801, 256, %s6, [#allocation4], 128, 128, 8
    $region37: #{tpu_custom_call.1} parent=1 // pred_fallthru
      _
    // Predicated region
    $region38: #{tpu_custom_call.1} parent=1 // pred_check
      _
    $region39: #{tpu_custom_call.1} parent=1 // pred_check_branch
      %808 = sbr.rel (0) target = $region41
    $region40: #{tpu_custom_call.1} parent=1 // pred_region
      %809 = dma.done [#allocation4], 256
    $region41: #{tpu_custom_call.1} parent=1 // pred_fallthru
      _
    %810 = vsyncpa [#allocation3], 1
    %811 = vsyncpa [#allocation6], 1
    %812 = vsyncpa [#allocation4], 1

</llo_original>
